<compile_context>
chip_gen: v7x
topology: tpu7x:2x2x1
jax: 0.10.0
libtpu: 0.0.40
codegen_flags: <defaults>
</compile_context>

<pallas_src>
import functools

import jax
import jax.numpy as jnp
from jax.experimental import pallas as pl
from jax.experimental.pallas import tpu as pltpu


# --------------------------------------------------------------------------- #
# Kernels
# --------------------------------------------------------------------------- #

def _conv1x1_bn_relu_kernel(x_ref, w_ref, shift_ref, o_ref):
    # x_ref:     (1, Cin, THW)   bf16/f32 spatial tile of one batch element (NCHW)
    # w_ref:     (Cout, Cin)     1x1 conv weight with BN scale folded in
    # shift_ref: (Cout, 1)       f32 folded BN shift = beta - mean * gamma / sqrt(var+eps)
    # o_ref:     (1, Cout, THW)
    acc = jnp.dot(w_ref[...], x_ref[0], preferred_element_type=jnp.float32)
    y = acc + shift_ref[...]                       # broadcast over spatial lanes
    o_ref[0] = jnp.maximum(y, 0.0).astype(o_ref.dtype)


def _conv1x1_bn_relu_ksplit_kernel(x_ref, w_ref, shift_ref, o_ref, acc_ref):
    # Same computation, but with a Cin ("K") reduction grid axis (axis 2,
    # "arbitrary") and a resident f32 VMEM accumulator.
    k = pl.program_id(2)

    @pl.when(k == 0)
    def _():
        acc_ref[...] = jnp.zeros_like(acc_ref)

    acc_ref[...] += jnp.dot(w_ref[...], x_ref[0],
                            preferred_element_type=jnp.float32)

    @pl.when(k == pl.num_programs(2) - 1)
    def _():
        y = acc_ref[...] + shift_ref[...]
        o_ref[0] = jnp.maximum(y, 0.0).astype(o_ref.dtype)


# --------------------------------------------------------------------------- #
# Tiling / VMEM budgeting helpers
# --------------------------------------------------------------------------- #

def _vmem_limit_bytes():
    """Per-generation scoped-VMEM limit (v5e/v6e: 128 MiB, v7x: 64 MiB physical)."""
    cap = 64 * 1024 * 1024                       # conservative default (v7x physical)
    try:
        info = pltpu.get_tpu_info()
        cap = int(getattr(info, "vmem_capacity_bytes", cap))
    except Exception:
        pass
    return max(32 * 1024 * 1024, min(int(cap * 0.8), cap - 8 * 1024 * 1024))


def _resident_spec(block_shape, index_map):
    """Constant-index block: single-buffered to save VMEM (weight residency)."""
    try:
        if hasattr(pl, "Buffered"):
            return pl.BlockSpec(block_shape, index_map, pipeline_mode=pl.Buffered(1))
    except TypeError:
        pass
    return pl.BlockSpec(block_shape, index_map)


def _choose_tile_hw(hw, max_tile):
    """Pick a lane-dense spatial tile. Returns (tile, pad)."""
    if hw <= max_tile:
        return hw, 0                       # one block == full dim (always legal)
    t = (max_tile // 128) * 128
    while t >= 128:
        if hw % t == 0:
            return t, 0                    # 128-multiple dividing HW -> no padding
        t -= 128
    tile = (max_tile // 128) * 128         # rare ragged fallback: pad once
    return tile, (-hw) % tile


def _k_divisors(cin):
    """Candidate K-split sizes: multiples of 128 dividing Cin, largest first."""
    return [d for d in range(cin - (cin % 128), 127, -128) if d < cin and cin % d == 0]


def _select_tiling(n, hw, cin, cout, in_bytes, out_bytes, budget, max_tile_hw):
    """Pick (tile_hw, pad, tk) fitting the per-generation VMEM budget."""

    def vmem_need(tile, tk, w_bufs):
        x_b = 2 * tk * tile * in_bytes            # double-buffered activation tile
        w_b = w_bufs * cout * tk * in_bytes       # weight (1 buffer when resident)
        o_b = 2 * cout * tile * out_bytes         # double-buffered output tile
        acc_b = cout * tile * 4 if tk < cin else 0
        return x_b + w_b + o_b + acc_b + cout * 4

    caps = sorted({c for c in (max_tile_hw, 2048, 1024, 512, 256, 128)
                   if 128 <= c <= max_tile_hw}, reverse=True)
    if not caps:
        caps = [max(128, max_tile_hw)]

    for cap in caps:
        tile, pad = _choose_tile_hw(hw, cap)
        # v7x has two TensorCores: make sure the "parallel" grid has >= 2 steps.
        if n * ((hw + pad) // tile) == 1 and tile % 256 == 0:
            tile //= 2
            pad = (-hw) % tile
        if vmem_need(tile, cin, 1) <= budget:
            return tile, pad, cin
        for tk in _k_divisors(cin):
            if vmem_need(tile, tk, 2) <= budget:
                return tile, pad, tk
    # Fallback: smallest spatial tile, full K.
    tile, pad = _choose_tile_hw(hw, 128)
    return tile, pad, cin


# --------------------------------------------------------------------------- #
# Wrapper
# --------------------------------------------------------------------------- #

@functools.partial(
    jax.jit,
    static_argnames=("stride", "eps", "max_tile_hw", "compute_dtype",
                     "out_dtype", "k_split"))
def conv1x1_bn_relu(x, weight, gamma, beta, running_mean, running_var, *,
                    stride=1, eps=1e-5, max_tile_hw=2048,
                    compute_dtype=jnp.bfloat16, out_dtype=None, k_split=None):
    """Forward of Conv1x1 (conv1x1 bias=False + BN(eval) + ReLU).

    x:       (N, Cin, H, W)        NCHW
    weight:  (Cout, Cin, 1, 1)     conv weight (bias=False)
    gamma, beta, running_mean, running_var: (Cout,)
    returns: (N, Cout, Hout, Wout) NCHW, dtype out_dtype (default: x.dtype)
    """
    n, cin, h, w = x.shape
    cout = weight.shape[0]
    out_dtype = x.dtype if out_dtype is None else out_dtype
    # TODO(synk): groups > 1 (grouped 1x1 conv) not implemented; kernel assumes groups=1.

    # 1x1 conv with padding 0 and stride s == spatial subsampling.
    # TODO(synk): fuse the stride subsampling into the activation BlockSpec
    # (DMA-level row/column skipping). Keeping the kept elements lane-dense
    # without a tiny trailing block dim needs strided in-kernel loads; left as
    # an XLA slice for now (stride>1 is the secondary path).
    if stride != 1:
        x = x[:, :, ::stride, ::stride]
    hout, wout = x.shape[2], x.shape[3]
    hw = hout * wout

    # NCHW-native view: (N, Cin, H, W) -> (N, Cin, H*W). Contiguous reshape, no
    # transpose. Cast activations + BN-folded weight to bf16 for the MXU.
    x3 = x.reshape(n, cin, hw).astype(compute_dtype)

    scale = gamma / jnp.sqrt(running_var + eps)                       # (Cout,)
    w2 = (weight.reshape(cout, cin) * scale[:, None]).astype(compute_dtype)
    shift = (beta - running_mean * scale).reshape(cout, 1).astype(jnp.float32)

    in_bytes = jax.dtypes.canonicalize_dtype(compute_dtype).itemsize
    out_bytes = jax.dtypes.canonicalize_dtype(out_dtype).itemsize

    vmem_limit = _vmem_limit_bytes()
    budget = vmem_limit - 4 * 1024 * 1024         # headroom for Mosaic scratch
    tile_hw, pad, tk = _select_tiling(n, hw, cin, cout, in_bytes, out_bytes,
                                      budget, max_tile_hw)
    if k_split is not None and 0 < k_split < cin and cin % k_split == 0:
        tk = k_split                              # test / tuning hook

    if pad:
        # Rare ragged fallback; pad columns are sliced off after the kernel.
        x3 = jnp.pad(x3, ((0, 0), (0, 0), (0, pad)))
    hw_p = hw + pad
    nb = hw_p // tile_hw
    nk = cin // tk

    cost = pl.CostEstimate(
        flops=2 * n * hw * cin * cout,
        transcendentals=0,
        bytes_accessed=(in_bytes * (n * cin * hw + cout * cin)
                        + 4 * cout + out_bytes * n * cout * hw),
    )

    if nk == 1:
        out3 = pl.pallas_call(
            _conv1x1_bn_relu_kernel,
            out_shape=jax.ShapeDtypeStruct((n, cout, hw_p), out_dtype),
            grid=(n, nb),
            in_specs=[
                pl.BlockSpec((1, cin, tile_hw), lambda b, j: (b, 0, j)),
                _resident_spec((cout, cin), lambda b, j: (0, 0)),      # weight (1 buf)
                _resident_spec((cout, 1), lambda b, j: (0, 0)),        # shift  (1 buf)
            ],
            out_specs=pl.BlockSpec((1, cout, tile_hw), lambda b, j: (b, 0, j)),
            compiler_params=pltpu.CompilerParams(
                dimension_semantics=("parallel", "parallel"),
                vmem_limit_bytes=vmem_limit,
            ),
            cost_estimate=cost,
        )(x3, w2, shift)
    else:
        out3 = pl.pallas_call(
            _conv1x1_bn_relu_ksplit_kernel,
            out_shape=jax.ShapeDtypeStruct((n, cout, hw_p), out_dtype),
            grid=(n, nb, nk),
            in_specs=[
                pl.BlockSpec((1, tk, tile_hw), lambda b, j, k: (b, k, j)),
                pl.BlockSpec((cout, tk), lambda b, j, k: (0, k)),
                _resident_spec((cout, 1), lambda b, j, k: (0, 0)),
            ],
            out_specs=pl.BlockSpec((1, cout, tile_hw), lambda b, j, k: (b, 0, j)),
            scratch_shapes=[pltpu.VMEM((cout, tile_hw), jnp.float32)],
            compiler_params=pltpu.CompilerParams(
                dimension_semantics=("parallel", "parallel", "arbitrary"),
                vmem_limit_bytes=vmem_limit,
            ),
            cost_estimate=cost,
        )(x3, w2, shift)

    if pad:
        out3 = out3[:, :, :hw]
    # (N, Cout, H*W) -> (N, Cout, Hout, Wout): free reshape, already NCHW.
    return out3.reshape(n, cout, hout, wout)


# --------------------------------------------------------------------------- #
# Self-test
# --------------------------------------------------------------------------- #

if __name__ == "__main__":
    key = jax.random.PRNGKey(0)
    k_x, k_w, k_g, k_b, k_m, k_v = jax.random.split(key, 6)

    def make_params(kx, kw, kg, kb, km, kv, n, cin, hh, ww, cout):
        x_ = jax.random.normal(kx, (n, cin, hh, ww), dtype=jnp.float32)
        w_ = jax.random.normal(kw, (cout, cin, 1, 1), dtype=jnp.float32) * 0.1
        g_ = jax.random.normal(kg, (cout,), dtype=jnp.float32) * 0.1 + 1.0
        b_ = jax.random.normal(kb, (cout,), dtype=jnp.float32) * 0.1
        m_ = jax.random.normal(km, (cout,), dtype=jnp.float32) * 0.1
        v_ = jax.nn.softplus(jax.random.normal(kv, (cout,), dtype=jnp.float32)) + 0.5
        return x_, w_, g_, b_, m_, v_

    def ref_fn(x_in, w_in, g_, b_, m_, v_, stride, eps=1e-5):
        xs = x_in[:, :, ::stride, ::stride]
        co, ci = w_in.shape[0], w_in.shape[1]
        y = jnp.einsum("nchw,oc->nohw", xs, w_in.reshape(co, ci))
        s_ = g_ / jnp.sqrt(v_ + eps)
        y = y * s_[None, :, None, None] + (b_ - m_ * s_)[None, :, None, None]
        return jnp.maximum(y, 0.0)

    # --- small case matching the module defaults -------------------------- #
    N, CIN, H, W, COUT = 2, 4, 16, 16, 8
    x, weight, gamma, beta, rmean, rvar = make_params(k_x, k_w, k_g, k_b, k_m, k_v,
                                                      N, CIN, H, W, COUT)

    # stride = 1, bf16 compute (default)
    out1 = jax.block_until_ready(
        conv1x1_bn_relu(x, weight, gamma, beta, rmean, rvar, stride=1))
    ref1 = ref_fn(x, weight, gamma, beta, rmean, rvar, 1)
    assert out1.shape == (N, COUT, H, W)
    assert jnp.allclose(out1, ref1, atol=5e-2, rtol=5e-2)

    # stride = 2 (exercises the subsampling + small-spatial path)
    out2 = jax.block_until_ready(
        conv1x1_bn_relu(x, weight, gamma, beta, rmean, rvar, stride=2))
    ref2 = ref_fn(x, weight, gamma, beta, rmean, rvar, 2)
    assert out2.shape == (N, COUT, H // 2, W // 2)
    assert jnp.allclose(out2, ref2, atol=5e-2, rtol=5e-2)

    # f32 compute path (tight tolerance)
    out3 = jax.block_until_ready(
        conv1x1_bn_relu(x, weight, gamma, beta, rmean, rvar, stride=1,
                        compute_dtype=jnp.float32))
    assert jnp.allclose(out3, ref1, atol=1e-4, rtol=1e-4)

    # larger-channel case exercising the Cin reduction split + accumulator path
    k2 = jax.random.split(jax.random.PRNGKey(0), 6)
    N2, CIN2, H2, W2, COUT2 = 1, 256, 8, 8, 16
    x2, w2p, g2, b2, m2, v2 = make_params(*k2, N2, CIN2, H2, W2, COUT2)
    out4 = jax.block_until_ready(
        conv1x1_bn_relu(x2, w2p, g2, b2, m2, v2, stride=1, k_split=128))
    ref4 = ref_fn(x2, w2p, g2, b2, m2, v2, 1)
    assert out4.shape == (N2, COUT2, H2, W2)
    assert jnp.allclose(out4, ref4, atol=5e-2, rtol=5e-2)

    print("KERNEL_OK")
</pallas_src>

<mosaic_0001>
module attributes {stable_mosaic.version = 11 : i64} {
  func.func @_conv1x1_bn_relu_kernel(%arg0: i32, %arg1: i32, %arg2: memref<1x4x256xbf16, #tpu.memory_space<vmem>>, %arg3: memref<8x4xbf16, #tpu.memory_space<vmem>>, %arg4: memref<8x1xf32, #tpu.memory_space<vmem>>, %arg5: memref<1x8x256xf32, #tpu.memory_space<vmem>>) attributes {dimension_semantics = [#tpu.dimension_semantics<parallel>, #tpu.dimension_semantics<parallel>], iteration_bounds = array<i64: 2, 1>, scalar_prefetch = 0 : i64, scratch_operands = 0 : i64, tpu.core_type = #tpu.core_type<tc>, window_params = [{transform_indices = @transform_0, window_bounds = array<i64: 1, 4, 256>}, {pipeline_mode = #tpu.pipeline_mode<synchronous>, transform_indices = @transform_1, window_bounds = array<i64: 8, 4>}, {pipeline_mode = #tpu.pipeline_mode<synchronous>, transform_indices = @transform_2, window_bounds = array<i64: 8, 1>}, {transform_indices = @transform_3, window_bounds = array<i64: 1, 8, 256>}]} {
    %c0 = arith.constant 0 : index
    %c0_0 = arith.constant 0 : index
    %0 = vector.load %arg3[%c0, %c0_0] : memref<8x4xbf16, #tpu.memory_space<vmem>>, vector<8x4xbf16>
    %c0_1 = arith.constant 0 : index
    %c0_2 = arith.constant 0 : index
    %c0_3 = arith.constant 0 : index
    %1 = vector.load %arg2[%c0_1, %c0_2, %c0_3] : memref<1x4x256xbf16, #tpu.memory_space<vmem>>, vector<1x4x256xbf16>
    %2 = vector.shape_cast %1 : vector<1x4x256xbf16> to vector<4x256xbf16>
    %cst = arith.constant dense<0.000000e+00> : vector<8x256xf32>
    %3 = tpu.matmul %0, %2, %cst {dimension_numbers = #tpu.dot_dimension_numbers<[1], [0], [0], [1], [0, 0, 1, 1], [], []>} : vector<8x4xbf16>, vector<4x256xbf16>, vector<8x256xf32> -> vector<8x256xf32>
    %c0_4 = arith.constant 0 : index
    %c0_5 = arith.constant 0 : index
    %4 = vector.load %arg4[%c0_4, %c0_5] : memref<8x1xf32, #tpu.memory_space<vmem>>, vector<8x1xf32>
    %5 = vector.broadcast %4 : vector<8x1xf32> to vector<8x256xf32>
    %6 = arith.addf %3, %5 : vector<8x256xf32>
    %cst_6 = arith.constant 0.000000e+00 : f32
    %7 = vector.broadcast %cst_6 : f32 to vector<8x256xf32>
    %8 = arith.maximumf %6, %7 : vector<8x256xf32>
    %c0_7 = arith.constant 0 : index
    %c0_8 = arith.constant 0 : index
    %c0_9 = arith.constant 0 : index
    %9 = vector.load %arg5[%c0_7, %c0_8, %c0_9] : memref<1x8x256xf32, #tpu.memory_space<vmem>>, vector<1x8x256xf32>
    %10 = vector.shape_cast %9 : vector<1x8x256xf32> to vector<8x256xf32>
    %11 = vector.shape_cast %8 : vector<8x256xf32> to vector<1x8x256xf32>
    tpu.vector_store %arg5[%c0_7, %c0_8, %c0_9], %11 {strides = array<i32>} : memref<1x8x256xf32, #tpu.memory_space<vmem>>, vector<1x8x256xf32>,
    return
  }
  func.func @transform_0(%arg0: i32, %arg1: i32) -> (i32, i32, i32) {
    %c0_i32 = arith.constant 0 : i32
    %c0_i32_0 = arith.constant 0 : i32
    return %arg0, %c0_i32, %arg1 : i32, i32, i32
  }
  func.func @transform_1(%arg0: i32, %arg1: i32) -> (i32, i32) {
    %c0_i32 = arith.constant 0 : i32
    %c0_i32_0 = arith.constant 0 : i32
    %c0_i32_1 = arith.constant 0 : i32
    return %c0_i32, %c0_i32_0 : i32, i32
  }
  func.func @transform_2(%arg0: i32, %arg1: i32) -> (i32, i32) {
    %c0_i32 = arith.constant 0 : i32
    %c0_i32_0 = arith.constant 0 : i32
    %c0_i32_1 = arith.constant 0 : i32
    return %c0_i32, %c0_i32_0 : i32, i32
  }
  func.func @transform_3(%arg0: i32, %arg1: i32) -> (i32, i32, i32) {
    %c0_i32 = arith.constant 0 : i32
    %c0_i32_0 = arith.constant 0 : i32
    return %arg0, %c0_i32, %arg1 : i32, i32, i32
  }
}

</mosaic_0001>

<llo_original>
// kernel: conv1x1_bn_relu.1
$region0: #{conv1x1_bn_relu.1}
  #allocation0 [shape = 'u32[]', space=smem, size = 0x4, offset = 0x4, fixed_abs, tag = 'smem constant byte address 0x4 - core index']
  #allocation1 [shape = 'u32[144,128]{1,0:T(1,128)}', space=vmem, size = 0x12000, scoped, tag = 'internal scratch']
  %s0 = inlined_call_operand.vmem [shape: bf16[2,4,256], index: 0, kind: input, shape index: {}]
  %s1 = inlined_call_operand.vmem [shape: bf16[8,4], index: 1, kind: input, shape index: {}]
  %s2 = inlined_call_operand.vmem [shape: f32[8,1], index: 2, kind: input, shape index: {}]
  %s3 = inlined_call_operand.vmem [shape: f32[2,8,256], index: 3, kind: output, shape index: {}]
  %s4 = sld [smem:[#allocation0]]
  $region45: #{conv1x1_bn_relu.1} parent=0
    _
  %s6 = ssub.s32 1, %s4
  %s7 = scalar_select 0, %s6, %s4
  loop: start=0, step=1, limit=4
  $region2: #{conv1x1_bn_relu.1} parent=0 // loop_pre_header
    _
  $region3: #{conv1x1_bn_relu.1} parent=0 // loop_header
    %s9 = sphi 0, %s13
    %p10 = scmp.ge.s32.totalorder %s9, 4
    %s16 = sphi 0, %s28
    %s17 = sphi 0, %s24
    %s18 = sphi 0, %s16
    %s19 = sphi 0, %s17
    %s20 = sphi 0, %s18
    %s21 = sphi 0, %s19
    %s33 = sphi 0, %s35
    %s36 = sphi 0, %s33
    %s37 = sphi 0, %s36
    %s53 = sphi 0, %s37
    %s57 = sphi 0, %s57
    %s59 = sphi 0, %s57
    %s60 = sphi 0, %s59
    %s74 = sphi 0, %s60
    %s78 = sphi 0, %s78
    %s80 = sphi 0, %s78
    %s81 = sphi 0, %s80
    %s95 = sphi 0, %s81
    %s103 = sphi 0, %s105
    %s106 = sphi 0, %s103
    %s107 = sphi 0, %s106
    %s123 = sphi 0, %s107
  $region4: #{conv1x1_bn_relu.1} parent=0 // loop_header_branch
    %12 = sbr.rel (%p10) target = $region8
  $region5: #{conv1x1_bn_relu.1} parent=0 // loop_body
    %s14 = ssub.s32 %s9, 1
    %s15 = ssub.s32 %s9, 2
    %s22 = sadd.s32 1, %s17
    %p23 = scmp.ge.s32.totalorder %s22, 1
    %s24 = scalar_select %p23, 0, %s22
    %s25 = sadd.s32 1, %s16
    %s26 = scalar_select %p23, %s25, %s16
    %p27 = scmp.ge.s32.totalorder %s26, 2
    %s28 = scalar_select %p27, 0, %s26
    %s29 = ssub.s32 %s16, %s28
    %s30 = ssub.s32 %s17, %s24
    %s31 = sor.u32 %s29, %s30
    %p32 = scmp.eq.s32.totalorder %s31, 0
    %s34 = sadd.s32 %s33, 1
    %s35 = scalar_select %p32, %s33, %s34
    %p38 = pneg %p32
    %p39 = scmp.eq.s32.totalorder %s9, 1
    %p40 = por %p38, %p39
    %p41 = scmp.ne.s32.totalorder %s33, %s36
    %p42 = scmp.eq.s32.totalorder %s9, 0
    %p43 = por %p41, %p42
    %p44 = scmp.ne.s32.totalorder %s33, %s36
    %p45 = scmp.eq.s32.totalorder %s14, 1
    %p46 = por %p44, %p45
    %p47 = scmp.ne.s32.totalorder %s36, %s37
    %p48 = scmp.eq.s32.totalorder %s14, 0
    %p49 = por %p47, %p48
    %p50 = scmp.ne.s32.totalorder %s36, %s37
    %p51 = scmp.eq.s32.totalorder %s15, 1
    %p52 = por %p50, %p51
    %p54 = scmp.ne.s32.totalorder %s37, %s53
    %p55 = scmp.eq.s32.totalorder %s15, 0
    %p56 = por %p54, %p55
    %s58 = sadd.s32 %s57, 1
    %p61 = scmp.eq.s32.totalorder %s9, 1
    %p62 = scmp.ne.s32.totalorder %s57, %s59
    %p63 = scmp.eq.s32.totalorder %s9, 0
    %p64 = por %p62, %p63
    %p65 = scmp.ne.s32.totalorder %s57, %s59
    %p66 = scmp.eq.s32.totalorder %s14, 1
    %p67 = por %p65, %p66
    %p68 = scmp.ne.s32.totalorder %s59, %s60
    %p69 = scmp.eq.s32.totalorder %s14, 0
    %p70 = por %p68, %p69
    %p71 = scmp.ne.s32.totalorder %s59, %s60
    %p72 = scmp.eq.s32.totalorder %s15, 1
    %p73 = por %p71, %p72
    %p75 = scmp.ne.s32.totalorder %s60, %s74
    %p76 = scmp.eq.s32.totalorder %s15, 0
    %p77 = por %p75, %p76
    %s79 = sadd.s32 %s78, 1
    %p82 = scmp.eq.s32.totalorder %s9, 1
    %p83 = scmp.ne.s32.totalorder %s78, %s80
    %p84 = scmp.eq.s32.totalorder %s9, 0
    %p85 = por %p83, %p84
    %p86 = scmp.ne.s32.totalorder %s78, %s80
    %p87 = scmp.eq.s32.totalorder %s14, 1
    %p88 = por %p86, %p87
    %p89 = scmp.ne.s32.totalorder %s80, %s81
    %p90 = scmp.eq.s32.totalorder %s14, 0
    %p91 = por %p89, %p90
    %p92 = scmp.ne.s32.totalorder %s80, %s81
    %p93 = scmp.eq.s32.totalorder %s15, 1
    %p94 = por %p92, %p93
    %p96 = scmp.ne.s32.totalorder %s81, %s95
    %p97 = scmp.eq.s32.totalorder %s15, 0
    %p98 = por %p96, %p97
    %s99 = ssub.s32 %s16, %s28
    %s100 = ssub.s32 %s17, %s24
    %s101 = sor.u32 %s99, %s100
    %p102 = scmp.eq.s32.totalorder %s101, 0
    %s104 = sadd.s32 %s103, 1
    %s105 = scalar_select %p102, %s103, %s104
    %p108 = pneg %p102
    %p109 = scmp.eq.s32.totalorder %s9, 1
    %p110 = por %p108, %p109
    %p111 = scmp.ne.s32.totalorder %s103, %s106
    %p112 = scmp.eq.s32.totalorder %s9, 0
    %p113 = por %p111, %p112
    %p114 = scmp.ne.s32.totalorder %s103, %s106
    %p115 = scmp.eq.s32.totalorder %s14, 1
    %p116 = por %p114, %p115
    %p117 = scmp.ne.s32.totalorder %s106, %s107
    %p118 = scmp.eq.s32.totalorder %s14, 0
    %p119 = por %p117, %p118
    %p120 = scmp.ne.s32.totalorder %s106, %s107
    %p121 = scmp.eq.s32.totalorder %s15, 1
    %p122 = por %p120, %p121
    %p124 = scmp.ne.s32.totalorder %s107, %s123
    %p125 = scmp.eq.s32.totalorder %s15, 0
    %p126 = por %p124, %p125
    %p127 = scmp.le.s32.totalorder 1, %s9
    %p128 = scmp.lt.s32.totalorder %s9, 3
    %p129 = pnand %p127, %p128
    %p130 = pneg %p129
    // Predicated region
    $region9: #{conv1x1_bn_relu.1} parent=5 // pred_check
      _
    $region10: #{conv1x1_bn_relu.1} parent=5 // pred_check_branch
      %132 = sbr.rel (%p129) target = $region12
    $region11: #{conv1x1_bn_relu.1} parent=5 // pred_region
      %s133 = ssub.s32 %s9, 1
      // Predicated region
      $region13: #{conv1x1_bn_relu.1} parent=11 // pred_check
        %p134 = pneg %p70
      $region14: #{conv1x1_bn_relu.1} parent=11 // pred_check_branch
        %136 = sbr.rel (%p134) target = $region16
      $region15: #{conv1x1_bn_relu.1} parent=11 // pred_region
        _
      $region16: #{conv1x1_bn_relu.1} parent=11 // pred_fallthru
        _
      // Predicated region
      $region17: #{conv1x1_bn_relu.1} parent=11 // pred_check
        %p137 = pneg %p91
      $region18: #{conv1x1_bn_relu.1} parent=11 // pred_check_branch
        %139 = sbr.rel (%p137) target = $region20
      $region19: #{conv1x1_bn_relu.1} parent=11 // pred_region
        _
      $region20: #{conv1x1_bn_relu.1} parent=11 // pred_fallthru
        _
    $region12: #{conv1x1_bn_relu.1} parent=5 // pred_fallthru
      _
    %p140 = scmp.lt.s32.totalorder %s9, 2
    // Predicated region
    $region21: #{conv1x1_bn_relu.1} parent=5 // pred_check
      %p141 = pneg %p140
    $region22: #{conv1x1_bn_relu.1} parent=5 // pred_check_branch
      %143 = sbr.rel (%p141) target = $region24
    $region23: #{conv1x1_bn_relu.1} parent=5 // pred_region
      // Predicated region
      $region25: #{conv1x1_bn_relu.1} parent=23 // pred_check
        %p144 = pneg %p43
      $region26: #{conv1x1_bn_relu.1} parent=23 // pred_check_branch
        %146 = sbr.rel (%p144) target = $region28
      $region27: #{conv1x1_bn_relu.1} parent=23 // pred_region
        %s147 = smul.u32 2, %s17
        %p148 = scmp.lt.s32.totalorder %s16, 1
        %s149 = scalar_select %p148, %s16, 1
        %p150 = scmp.lt.s32.totalorder %s147, 1
        %s151 = scalar_select %p150, %s147, 1
        %s152 = smul.addr %s149, 2
        %s153 = sadd.s32 %s151, %s152
        %s154 = smul.addr %s153, 2
        %s155 = scalar_lea.vmem %s0, %s154
        %s156 = smul.u32 2, %s17
      $region28: #{conv1x1_bn_relu.1} parent=23 // pred_fallthru
        _
    $region24: #{conv1x1_bn_relu.1} parent=5 // pred_fallthru
      _
    %p157 = scmp.le.s32.totalorder 1, %s9
    %p158 = scmp.lt.s32.totalorder %s9, 3
    %p159 = pnand %p157, %p158
    %p160 = pneg %p159
    // Predicated region
    $region29: #{conv1x1_bn_relu.1} parent=5 // pred_check
      _
    $region30: #{conv1x1_bn_relu.1} parent=5 // pred_check_branch
      %162 = sbr.rel (%p159) target = $region32
    $region31: #{conv1x1_bn_relu.1} parent=5 // pred_region
      %s163 = ssub.s32 %s9, 1
      %s164 = smul.u32 2, %s19
      %p165 = scmp.lt.s32.totalorder %s18, 1
      %s166 = scalar_select %p165, %s18, 1
      %p167 = scmp.lt.s32.totalorder %s164, 1
      %s168 = scalar_select %p167, %s164, 1
      %s169 = smul.addr %s166, 2
      %s170 = sadd.s32 %s168, %s169
      %s171 = smul.addr %s170, 2
      %s172 = scalar_lea.vmem %s0, %s171
      %p173 = pneg %p49
      %p174 = pneg %p46
      %p175 = pneg %p70
      %p176 = pneg %p67
      %p177 = pneg %p91
      %p178 = pneg %p88
      %p179 = pneg %p119
      %p180 = pneg %p116
      %s181 = smul.u32 2, %s19
      %p182 = scmp.lt.s32.totalorder %s18, 1
      %s183 = scalar_select %p182, %s18, 1
      %p184 = scmp.lt.s32.totalorder %s181, 1
      %s185 = scalar_select %p184, %s181, 1
      %s186 = smul.addr %s183, 2
      %s187 = sadd.s32 %s185, %s186
      %s188 = smul.addr %s187, 8
      %s189 = scalar_lea.vmem %s3, %s188
      %s190 = smul.u32 2, %s19
      %p191 = scmp.lt.s32.totalorder %s18, 1
      %s192 = scalar_select %p191, %s18, 1
      %p193 = scmp.lt.s32.totalorder %s190, 1
      %s194 = scalar_select %p193, %s190, 1
      %s195 = smul.addr %s192, 2
      %s196 = sadd.s32 %s194, %s195
      %s197 = smul.addr %s196, 2
      %s198 = scalar_lea.vmem %s0, %s197
      %s199 = smul.u32 2, %s19
      %s200 = smul.u32 2, %s19
      %p201 = scmp.lt.s32.totalorder %s18, 1
      %s202 = scalar_select %p201, %s18, 1
      %p203 = scmp.lt.s32.totalorder %s200, 1
      %s204 = scalar_select %p203, %s200, 1
      %s205 = smul.addr %s202, 2
      %s206 = sadd.s32 %s204, %s205
      %s207 = smul.addr %s206, 8
      %s208 = scalar_lea.vmem %s3, %s207
      %s209 = smul.u32 2, %s19
      %v211 = vld [vmem:[%s1] sm:$0xf]
      %v212 = vld [vmem:[%s198] sm:$0xf]
      %v213 = vld [vmem:[%s2] sm:$0xff]
      %215 = vset.pattern.permute.xlu0 0
      %216 = vperm.xlu0 %215, %v213
      %v217 = vpop.permute.xlu0 %216
      %v221 = vunpack.c.l.s4 1983009808
      %v222 = vunpack.c.0.s8 %v221
      %v223 = vlaneseq
      %v224 = vshrl.u32 %v223, 7
      %v225 = vsub.s32 %v222, %v224
      %v226 = vrot.slane %v212, %v225
      %v227 = vcombine.high %v226, %v226
      %vm228 = vcmask 31744
      %v230 = vsel %vm228, %v211, 0
      %vm232 = vcmask 1041408
      %v234 = vsel %vm232, %v226, 0
      %v237 = vsel %vm232, %v227, 0
      %239 = vmatprep.subr.bf16.mxu0 %v237
      %240 = vmatpush1.bf16.msra.mxu0 %v234
      %241 = vmatprep.subr.bf16.mxu0 0
      %242 = vmatpush1.bf16.msra.mxu0 0
      %243 = vmatprep.subr.bf16.mxu0 0
      %244 = vmatpush1.bf16.msra.mxu0 0
      %245 = vmatprep.subr.bf16.mxu0 0
      %246 = vmatpush1.bf16.msra.mxu0 0
      %247 = vmatprep.subr.bf16.mxu0 0
      %248 = vmatpush1.bf16.msra.mxu0 0
      %249 = vmatprep.subr.bf16.mxu0 0
      %250 = vmatpush1.bf16.msra.mxu0 0
      %251 = vmatprep.subr.bf16.mxu0 0
      %252 = vmatpush1.bf16.msra.mxu0 0
      %253 = vmatprep.subr.bf16.mxu0 0
      %254 = vmatpush1.bf16.msra.mxu0 0
      %255 = vmatprep.subr.bf16.mxu0 0
      %256 = vmatpush1.bf16.msra.mxu0 0
      %257 = vmatprep.subr.bf16.mxu0 0
      %258 = vmatpush1.bf16.msra.mxu0 0
      %259 = vmatprep.subr.bf16.mxu0 0
      %260 = vmatpush1.bf16.msra.mxu0 0
      %261 = vmatprep.subr.bf16.mxu0 0
      %262 = vmatpush1.bf16.msra.mxu0 0
      %263 = vmatprep.subr.bf16.mxu0 0
      %264 = vmatpush1.bf16.msra.mxu0 0
      %265 = vmatprep.subr.bf16.mxu0 0
      %266 = vmatpush1.bf16.msra.mxu0 0
      %267 = vmatprep.subr.bf16.mxu0 0
      %268 = vmatpush1.bf16.msra.mxu0 0
      %269 = vmatprep.subr.bf16.mxu0 0
      %270 = vmatpush1.bf16.msra.mxu0 0
      %271 = vmatprep.mubr.bf16.mxu0 0
      %272 = vmatmul.mubr.bf16.gmra.mrb[0].mxu0 %v230
      %v273 = vpop.f32.mrb[0].mxu0
      %v274 = vadd.f32 %v217, %v273
      %v275 = vpop.f32.mrb[0].mxu0
      %v276 = vadd.f32 %v217, %v275
      %v277 = vpop.f32.mrb[0].mxu0
      %v278 = vpop.f32.mrb[0].mxu0
      %279 = vdwg.mxu0
      %v280 = vmax.f32 %v274, 0.0
      %v281 = vmax.f32 %v276, 0.0
      %282 = vst [vmem:[%s208] sm:$0xff] %v280
      %283 = vst [vmem:[%s208 + $0x8] sm:$0xff] %v281
      %s284 = smul.u32 2, %s19
      %p285 = scmp.lt.s32.totalorder %s18, 1
      %s286 = scalar_select %p285, %s18, 1
      %p287 = scmp.lt.s32.totalorder %s284, 1
      %s288 = scalar_select %p287, %s284, 1
      %s289 = smul.addr %s286, 2
      %s290 = sadd.s32 %s288, %s289
      %s291 = smul.addr %s290, 8
      %s292 = scalar_lea.vmem %s3, %s291
      // Predicated region
      $region33: #{conv1x1_bn_relu.1} parent=31 // pred_check
        %p293 = pneg %p116
      $region34: #{conv1x1_bn_relu.1} parent=31 // pred_check_branch
        %295 = sbr.rel (%p293) target = $region36
      $region35: #{conv1x1_bn_relu.1} parent=31 // pred_region
        %s296 = smul.u32 2, %s19
      $region36: #{conv1x1_bn_relu.1} parent=31 // pred_fallthru
        _
    $region32: #{conv1x1_bn_relu.1} parent=5 // pred_fallthru
      _
    %p297 = scmp.le.s32.totalorder 2, %s9
    // Predicated region
    $region37: #{conv1x1_bn_relu.1} parent=5 // pred_check
      %p298 = pneg %p297
    $region38: #{conv1x1_bn_relu.1} parent=5 // pred_check_branch
      %300 = sbr.rel (%p298) target = $region40
    $region39: #{conv1x1_bn_relu.1} parent=5 // pred_region
      %s301 = ssub.s32 %s9, 2
      // Predicated region
      $region41: #{conv1x1_bn_relu.1} parent=39 // pred_check
        %p302 = pneg %p122
      $region42: #{conv1x1_bn_relu.1} parent=39 // pred_check_branch
        %304 = sbr.rel (%p302) target = $region44
      $region43: #{conv1x1_bn_relu.1} parent=39 // pred_region
        %s305 = smul.u32 2, %s21
        %p306 = scmp.lt.s32.totalorder %s20, 1
        %s307 = scalar_select %p306, %s20, 1
        %p308 = scmp.lt.s32.totalorder %s305, 1
        %s309 = scalar_select %p308, %s305, 1
        %s310 = smul.addr %s307, 2
        %s311 = sadd.s32 %s309, %s310
        %s312 = smul.addr %s311, 8
        %s313 = scalar_lea.vmem %s3, %s312
      $region44: #{conv1x1_bn_relu.1} parent=39 // pred_fallthru
        _
    $region40: #{conv1x1_bn_relu.1} parent=5 // pred_fallthru
      _
  $region6: #{conv1x1_bn_relu.1} parent=0 // loop_footer
    %s13 = sadd.s32 1, %s9
  $region7: #{conv1x1_bn_relu.1} parent=0 // loop_footer_branch
    %8 = sbr.rel target = $region3
  $region8: #{conv1x1_bn_relu.1} parent=0 // loop_exit
    _

</llo_original>
